<compile_context>
chip_gen: v7x
topology: tpu7x:2x2x1
jax: 0.10.0
libtpu: 0.0.40
codegen_flags: <defaults>
</compile_context>

<pallas_src>
import functools
import math

import jax
import jax.numpy as jnp
from jax import lax
from jax.experimental import pallas as pl
from jax.experimental.pallas import tpu as pltpu

EPS_LN = 1e-5


def _layernorm(v, g, b):
    m = jnp.mean(v, axis=-1, keepdims=True)
    c = v - m
    var = jnp.mean(c * c, axis=-1, keepdims=True)
    return c * lax.rsqrt(var + EPS_LN) * g + b


def _full_spec(shape):
    n = len(shape)

    def imap(l):  # grid rank 1 in both calls
        return (0,) * n

    return pl.BlockSpec(shape, imap)


def _layer_spec(shape):
    n = len(shape)

    def imap(l):
        return (l,) + (0,) * n

    return pl.BlockSpec((1,) + shape, imap)


# ---------------------------------------------------------------------------
# Kernel 1: preprocess  (log|FFT| -> normalize -> input Linear -> cls/pos/pad)
# ---------------------------------------------------------------------------
def preprocess_kernel(x_ref, cos_ref, sin_ref, w_in_ref, b_in_ref,
                      cls_pos0_ref, pos_rest_ref, o_ref, *, B, T, S_pad, E):
    P = x_ref.shape[-1]
    x = x_ref[...].astype(jnp.bfloat16)                      # (B*T, P)
    # |fft(x)| for real x == sqrt((x @ cos)^2 + (x @ sin)^2)  (exact DFT)
    re = jnp.dot(x, cos_ref[...], preferred_element_type=jnp.float32)
    im = jnp.dot(x, sin_ref[...], preferred_element_type=jnp.float32)
    mag = jnp.log(jnp.sqrt(re * re + im * im) + 1e-10)
    mean = jnp.mean(mag, axis=-1, keepdims=True)
    c = mag - mean
    var = jnp.sum(c * c, axis=-1, keepdims=True) / (P - 1)   # torch.std: unbiased
    # NOTE: no eps, faithful to the reference (x - mean) / x.std()
    xn = c * lax.rsqrt(var)
    emb = jnp.dot(xn.astype(jnp.bfloat16), w_in_ref[...],
                  preferred_element_type=jnp.float32) + b_in_ref[...]   # (B*T, E)

    cls_row = cls_pos0_ref[...]                               # (1, E)  cls + pos[0]
    pos = pos_rest_ref[...]                                   # (T, E)
    pad = S_pad - (T + 1)
    rows = []
    for b in range(B):                                        # static unroll
        rows.append(cls_row)
        rows.append(emb[b * T:(b + 1) * T, :] + pos)
        if pad:
            rows.append(jnp.zeros((pad, E), jnp.float32))
    o_ref[...] = jnp.concatenate(rows, axis=0)                # one full-tile store


# ---------------------------------------------------------------------------
# Kernel 2: fused transformer (one AttentionBlock per grid step) + mlp_head
# ---------------------------------------------------------------------------
def vit_layers_kernel(
        init_ref,
        g1_ref, b1_ref, wq_ref, bq_ref, wk_ref, bk_ref, wv_ref, bv_ref,
        wo_ref, bo_ref, g2_ref, b2_ref, w1_ref, bb1_ref, w2_ref, bb2_ref,
        hg_ref, hbeta_ref, hw_ref, hbias_ref,
        o_ref, act_ref, ctx_ref, mask_ref,
        *, B, S, S_pad, E, num_heads):
    layer = pl.program_id(0)
    n_layers = pl.num_programs(0)
    hd = E // num_heads
    scale = 1.0 / math.sqrt(hd)
    BSp = B * S_pad

    # ---- layer 0: load initial activations, build additive attention mask ----
    @pl.when(layer == 0)
    def _init():
        act_ref[...] = init_ref[...]
        rows = lax.broadcasted_iota(jnp.int32, (BSp, BSp), 0)
        cols = lax.broadcasted_iota(jnp.int32, (BSp, BSp), 1)
        same_batch = (rows // S_pad) == (cols // S_pad)       # block-diagonal
        col_valid = (cols % S_pad) < S                        # mask the padding
        mask_ref[...] = jnp.where(same_batch & col_valid, 0.0, -1e30
                                  ).astype(jnp.float32)

    # ---- one AttentionBlock on VMEM-resident activations (B*S_pad, E) ----
    xf = act_ref[...]                                         # f32
    h = _layernorm(xf, g1_ref[0], b1_ref[0]).astype(jnp.bfloat16)
    q = (jnp.dot(h, wq_ref[0], preferred_element_type=jnp.float32)
         + bq_ref[0]).astype(jnp.bfloat16)
    k = (jnp.dot(h, wk_ref[0], preferred_element_type=jnp.float32)
         + bk_ref[0]).astype(jnp.bfloat16)
    v = (jnp.dot(h, wv_ref[0], preferred_element_type=jnp.float32)
         + bv_ref[0]).astype(jnp.bfloat16)

    mask = mask_ref[...]
    for head_i in range(num_heads):                           # static unroll
        sl = slice(head_i * hd, (head_i + 1) * hd)
        qh, kh, vh = q[:, sl], k[:, sl], v[:, sl]             # bf16 slices
        s = jnp.dot(qh, kh.T, preferred_element_type=jnp.float32) * scale + mask
        s = s - jnp.max(s, axis=-1, keepdims=True)
        p = jnp.exp(s)
        p = p * pl.reciprocal(jnp.sum(p, axis=-1, keepdims=True), approx=True)
        # write per-head context at its lane offset; ONE wo matmul afterwards
        ctx_ref[:, sl] = jnp.dot(p.astype(jnp.bfloat16), vh,
                                 preferred_element_type=jnp.float32)

    attn = jnp.dot(ctx_ref[...].astype(jnp.bfloat16), wo_ref[0],
                   preferred_element_type=jnp.float32) + bo_ref[0]
    xf = xf + attn

    h2 = _layernorm(xf, g2_ref[0], b2_ref[0]).astype(jnp.bfloat16)
    m = jnp.dot(h2, w1_ref[0], preferred_element_type=jnp.float32) + bb1_ref[0]
    # tanh-approx GELU (EUP); nn.GELU default is exact erf (~1e-3 deviation)
    m = jax.nn.gelu(m, approximate=True)
    m = jnp.dot(m.astype(jnp.bfloat16), w2_ref[0],
                preferred_element_type=jnp.float32) + bb2_ref[0]
    act_ref[...] = xf + m

    # ---- last layer: fused mlp_head (LayerNorm + Linear) on the cls rows ----
    @pl.when(layer == n_layers - 1)
    def _head():
        cls_rows = act_ref[pl.ds(0, B, stride=S_pad), :]      # strided sublane read
        hc = _layernorm(cls_rows, hg_ref[...], hbeta_ref[...])
        o_ref[...] = (jnp.dot(hc, hw_ref[...],
                              preferred_element_type=jnp.float32)
                      + hbias_ref[...])


# ---------------------------------------------------------------------------
# Wrapper
# ---------------------------------------------------------------------------
def vit_forward(x, params, cos_m, sin_m, num_heads):
    B, T, P = x.shape
    E = params["w_in"].shape[1]
    S = T + 1
    S_pad = ((S + 7) // 8) * 8                 # pad seq to sublane multiple
    L = params["g1"].shape[0]
    H = params["w1"].shape[-1]
    C = params["head_w"].shape[1]

    # one-time parameter-derived constants (dropout p=0.0 -> identity)
    cls_pos0 = params["cls"] + params["pos"][0:1]             # (1, E)
    pos_rest = params["pos"][1:S]                             # (T, E)
    x_flat = x.reshape(B * T, P)                              # free XLA reshape

    # ---- stage 1: preprocess (kept out of the layer loop -> VMEM budget) ----
    init_act = pl.pallas_call(
        functools.partial(preprocess_kernel, B=B, T=T, S_pad=S_pad, E=E),
        out_shape=jax.ShapeDtypeStruct((B * S_pad, E), jnp.float32),
        grid=(1,),
        in_specs=[
            _full_spec((B * T, P)),
            _full_spec((P, P)), _full_spec((P, P)),           # cos, sin (bf16)
            _full_spec((P, E)), _full_spec((1, E)),           # w_in, b_in
            _full_spec((1, E)), _full_spec((T, E)),           # cls+pos0, pos_rest
        ],
        out_specs=_full_spec((B * S_pad, E)),
        compiler_params=pltpu.CompilerParams(
            dimension_semantics=("arbitrary",)),
    )(x_flat, cos_m, sin_m, params["w_in"], params["b_in"], cls_pos0, pos_rest)

    # ---- stage 2: fused transformer layers + head ----
    kernel = functools.partial(vit_layers_kernel, B=B, S=S, S_pad=S_pad, E=E,
                               num_heads=num_heads)
    return pl.pallas_call(
        kernel,
        out_shape=jax.ShapeDtypeStruct((B, C), jnp.float32),
        grid=(L,),
        in_specs=[
            _full_spec((B * S_pad, E)),                       # initial activations
            _layer_spec((1, E)), _layer_spec((1, E)),         # g1, b1
            _layer_spec((E, E)), _layer_spec((1, E)),         # wq, bq
            _layer_spec((E, E)), _layer_spec((1, E)),         # wk, bk
            _layer_spec((E, E)), _layer_spec((1, E)),         # wv, bv
            _layer_spec((E, E)), _layer_spec((1, E)),         # wo, bo
            _layer_spec((1, E)), _layer_spec((1, E)),         # g2, b2
            _layer_spec((E, H)), _layer_spec((1, H)),         # w1, bb1
            _layer_spec((H, E)), _layer_spec((1, E)),         # w2, bb2
            _full_spec((1, E)), _full_spec((1, E)),           # head LN gamma/beta
            _full_spec((E, C)), _full_spec((1, C)),           # head linear
        ],
        out_specs=pl.BlockSpec((B, C), lambda l: (0, 0)),
        scratch_shapes=[
            pltpu.VMEM((B * S_pad, E), jnp.float32),          # activations
            pltpu.VMEM((B * S_pad, E), jnp.float32),          # per-head contexts
            pltpu.VMEM((B * S_pad, B * S_pad), jnp.float32),  # additive attn mask
        ],
        compiler_params=pltpu.CompilerParams(
            dimension_semantics=("arbitrary",),               # layer axis sequential
            vmem_limit_bytes=56 * 1024 * 1024),               # > default, < v7x 64MiB
    )(init_act,
      params["g1"], params["b1"], params["wq"], params["bq"],
      params["wk"], params["bk"], params["wv"], params["bv"],
      params["wo"], params["bo"], params["g2"], params["b2"],
      params["w1"], params["bb1"], params["w2"], params["bb2"],
      params["head_g"], params["head_b"], params["head_w"], params["head_bias"])


def make_dft_basis(P, dtype=jnp.bfloat16):
    n = jnp.arange(P, dtype=jnp.float32)
    ang = 2.0 * jnp.pi * jnp.outer(n, n) / P
    return jnp.cos(ang).astype(dtype), jnp.sin(ang).astype(dtype)


def init_params(key, P, E, H, num_layers, num_classes, num_patches):
    ks = jax.random.split(key, 10)
    s = 0.02

    def w(k, shape, dtype=jnp.float32):
        return (jax.random.normal(k, shape) * s).astype(dtype)

    lk = jax.random.split(ks[9], 6)
    return {
        # large matmul weights in bf16 (MXU-friendly, f32 accumulation in kernel)
        "w_in": w(ks[0], (P, E), jnp.bfloat16),
        "b_in": jnp.zeros((1, E), jnp.float32),
        "cls": jax.random.normal(ks[1], (1, E), jnp.float32),
        "pos": jax.random.normal(ks[2], (1 + num_patches, E), jnp.float32),
        "head_g": jnp.ones((1, E), jnp.float32),
        "head_b": jnp.zeros((1, E), jnp.float32),
        "head_w": w(ks[3], (E, num_classes)),
        "head_bias": jnp.zeros((1, num_classes), jnp.float32),
        # per-layer stacks (leading dim = layer)
        "g1": jnp.ones((num_layers, 1, E), jnp.float32),
        "b1": jnp.zeros((num_layers, 1, E), jnp.float32),
        "wq": w(lk[0], (num_layers, E, E), jnp.bfloat16),
        "bq": jnp.zeros((num_layers, 1, E), jnp.float32),
        "wk": w(lk[1], (num_layers, E, E), jnp.bfloat16),
        "bk": jnp.zeros((num_layers, 1, E), jnp.float32),
        "wv": w(lk[2], (num_layers, E, E), jnp.bfloat16),
        "bv": jnp.zeros((num_layers, 1, E), jnp.float32),
        "wo": w(lk[3], (num_layers, E, E), jnp.bfloat16),
        "bo": jnp.zeros((num_layers, 1, E), jnp.float32),
        "g2": jnp.ones((num_layers, 1, E), jnp.float32),
        "b2": jnp.zeros((num_layers, 1, E), jnp.float32),
        "w1": w(lk[4], (num_layers, E, H), jnp.bfloat16),
        "bb1": jnp.zeros((num_layers, 1, H), jnp.float32),
        "w2": w(lk[5], (num_layers, H, E), jnp.bfloat16),
        "bb2": jnp.zeros((num_layers, 1, E), jnp.float32),
    }


if __name__ == "__main__":
    B, T, P = 2, 8, 16          # batch, num_patches (seq), num_t_pints
    E, H = 32, 64               # embed_dim, hidden_dim
    num_heads, num_layers = 4, 2
    num_classes = 7
    num_patches = 8

    key = jax.random.PRNGKey(0)
    kx, kp = jax.random.split(key)
    x = jax.random.normal(kx, (B, T, P), dtype=jnp.float32)
    params = init_params(kp, P, E, H, num_layers, num_classes, num_patches)
    cos_m, sin_m = make_dft_basis(P)   # DFT basis built once, passed as constants

    out = vit_forward(x, params, cos_m, sin_m, num_heads)
    out = jax.block_until_ready(out)
    assert out.shape == (B, num_classes) and out.dtype == jnp.float32
    assert bool(jnp.all(jnp.isfinite(out)))
    print("KERNEL_OK")
</pallas_src>

<mosaic_0001>
module attributes {stable_mosaic.version = 11 : i64} {
  func.func @preprocess_kernel(%arg0: i32, %arg1: memref<16x16xf32, #tpu.memory_space<vmem>>, %arg2: memref<16x16xbf16, #tpu.memory_space<vmem>>, %arg3: memref<16x16xbf16, #tpu.memory_space<vmem>>, %arg4: memref<16x32xbf16, #tpu.memory_space<vmem>>, %arg5: memref<1x32xf32, #tpu.memory_space<vmem>>, %arg6: memref<1x32xf32, #tpu.memory_space<vmem>>, %arg7: memref<8x32xf32, #tpu.memory_space<vmem>>, %arg8: memref<32x32xf32, #tpu.memory_space<vmem>>) attributes {dimension_semantics = [#tpu.dimension_semantics<arbitrary>], iteration_bounds = array<i64: 1>, scalar_prefetch = 0 : i64, scratch_operands = 0 : i64, tpu.core_type = #tpu.core_type<tc>, window_params = [{pipeline_mode = #tpu.pipeline_mode<synchronous>, transform_indices = @transform_0, window_bounds = array<i64: 16, 16>}, {pipeline_mode = #tpu.pipeline_mode<synchronous>, transform_indices = @transform_1, window_bounds = array<i64: 16, 16>}, {pipeline_mode = #tpu.pipeline_mode<synchronous>, transform_indices = @transform_2, window_bounds = array<i64: 16, 16>}, {pipeline_mode = #tpu.pipeline_mode<synchronous>, transform_indices = @transform_3, window_bounds = array<i64: 16, 32>}, {pipeline_mode = #tpu.pipeline_mode<synchronous>, transform_indices = @transform_4, window_bounds = array<i64: 1, 32>}, {pipeline_mode = #tpu.pipeline_mode<synchronous>, transform_indices = @transform_5, window_bounds = array<i64: 1, 32>}, {pipeline_mode = #tpu.pipeline_mode<synchronous>, transform_indices = @transform_6, window_bounds = array<i64: 8, 32>}, {pipeline_mode = #tpu.pipeline_mode<synchronous>, transform_indices = @transform_7, window_bounds = array<i64: 32, 32>}]} {
    %c0 = arith.constant 0 : index
    %c0_0 = arith.constant 0 : index
    %0 = vector.load %arg1[%c0, %c0_0] : memref<16x16xf32, #tpu.memory_space<vmem>>, vector<16x16xf32>
    %1 = arith.truncf %0 : vector<16x16xf32> to vector<16x16xbf16>
    %c0_1 = arith.constant 0 : index
    %c0_2 = arith.constant 0 : index
    %2 = vector.load %arg2[%c0_1, %c0_2] : memref<16x16xbf16, #tpu.memory_space<vmem>>, vector<16x16xbf16>
    %cst = arith.constant dense<0.000000e+00> : vector<16x16xf32>
    %3 = tpu.matmul %1, %2, %cst {dimension_numbers = #tpu.dot_dimension_numbers<[1], [0], [0], [1], [0, 0, 1, 1], [], []>} : vector<16x16xbf16>, vector<16x16xbf16>, vector<16x16xf32> -> vector<16x16xf32>
    %c0_3 = arith.constant 0 : index
    %c0_4 = arith.constant 0 : index
    %4 = vector.load %arg3[%c0_3, %c0_4] : memref<16x16xbf16, #tpu.memory_space<vmem>>, vector<16x16xbf16>
    %cst_5 = arith.constant dense<0.000000e+00> : vector<16x16xf32>
    %5 = tpu.matmul %1, %4, %cst_5 {dimension_numbers = #tpu.dot_dimension_numbers<[1], [0], [0], [1], [0, 0, 1, 1], [], []>} : vector<16x16xbf16>, vector<16x16xbf16>, vector<16x16xf32> -> vector<16x16xf32>
    %6 = arith.mulf %3, %3 : vector<16x16xf32>
    %7 = arith.mulf %5, %5 : vector<16x16xf32>
    %8 = arith.addf %6, %7 : vector<16x16xf32>
    %9 = math.sqrt %8 : vector<16x16xf32>
    %cst_6 = arith.constant 1.000000e-10 : f32
    %10 = vector.broadcast %cst_6 : f32 to vector<16x16xf32>
    %11 = arith.addf %9, %10 : vector<16x16xf32>
    %12 = math.log %11 : vector<16x16xf32>
    %cst_7 = arith.constant dense<0.000000e+00> : vector<16xf32>
    %13 = vector.multi_reduction <add>, %12, %cst_7 [1] : vector<16x16xf32> to vector<16xf32>
    %14 = vector.shape_cast %13 : vector<16xf32> to vector<16x1xf32>
    %cst_8 = arith.constant 1.600000e+01 : f32
    %15 = vector.broadcast %cst_8 : f32 to vector<16x1xf32>
    %16 = arith.divf %14, %15 : vector<16x1xf32>
    %17 = vector.broadcast %16 : vector<16x1xf32> to vector<16x16xf32>
    %18 = arith.subf %12, %17 : vector<16x16xf32>
    %19 = arith.mulf %18, %18 : vector<16x16xf32>
    %cst_9 = arith.constant dense<0.000000e+00> : vector<16xf32>
    %20 = vector.multi_reduction <add>, %19, %cst_9 [1] : vector<16x16xf32> to vector<16xf32>
    %21 = vector.shape_cast %20 : vector<16xf32> to vector<16x1xf32>
    %cst_10 = arith.constant 1.500000e+01 : f32
    %22 = vector.broadcast %cst_10 : f32 to vector<16x1xf32>
    %23 = arith.divf %21, %22 : vector<16x1xf32>
    %24 = math.rsqrt %23 : vector<16x1xf32>
    %25 = vector.broadcast %24 : vector<16x1xf32> to vector<16x16xf32>
    %26 = arith.mulf %18, %25 : vector<16x16xf32>
    %27 = arith.truncf %26 : vector<16x16xf32> to vector<16x16xbf16>
    %c0_11 = arith.constant 0 : index
    %c0_12 = arith.constant 0 : index
    %28 = vector.load %arg4[%c0_11, %c0_12] : memref<16x32xbf16, #tpu.memory_space<vmem>>, vector<16x32xbf16>
    %cst_13 = arith.constant dense<0.000000e+00> : vector<16x32xf32>
    %29 = tpu.matmul %27, %28, %cst_13 {dimension_numbers = #tpu.dot_dimension_numbers<[1], [0], [0], [1], [0, 0, 1, 1], [], []>} : vector<16x16xbf16>, vector<16x32xbf16>, vector<16x32xf32> -> vector<16x32xf32>
    %c0_14 = arith.constant 0 : index
    %c0_15 = arith.constant 0 : index
    %30 = vector.load %arg5[%c0_14, %c0_15] : memref<1x32xf32, #tpu.memory_space<vmem>>, vector<1x32xf32>
    %31 = vector.broadcast %30 : vector<1x32xf32> to vector<16x32xf32>
    %32 = arith.addf %29, %31 : vector<16x32xf32>
    %c0_16 = arith.constant 0 : index
    %c0_17 = arith.constant 0 : index
    %33 = vector.load %arg6[%c0_16, %c0_17] : memref<1x32xf32, #tpu.memory_space<vmem>>, vector<1x32xf32>
    %c0_18 = arith.constant 0 : index
    %c0_19 = arith.constant 0 : index
    %34 = vector.load %arg7[%c0_18, %c0_19] : memref<8x32xf32, #tpu.memory_space<vmem>>, vector<8x32xf32>
    %35 = vector.extract_strided_slice %32 {offsets = [0, 0], sizes = [8, 32], strides = [1, 1]} : vector<16x32xf32> to vector<8x32xf32>
    %36 = arith.addf %35, %34 : vector<8x32xf32>
    %cst_20 = arith.constant 0.000000e+00 : f32
    %37 = vector.broadcast %cst_20 : f32 to vector<7x32xf32>
    %38 = vector.extract_strided_slice %32 {offsets = [8, 0], sizes = [8, 32], strides = [1, 1]} : vector<16x32xf32> to vector<8x32xf32>
    %39 = arith.addf %38, %34 : vector<8x32xf32>
    %cst_21 = arith.constant 0.000000e+00 : f32
    %40 = vector.broadcast %cst_21 : f32 to vector<7x32xf32>
    %41 = tpu.concatenate %33, %36, %37, %33, %39, %40 in 0 : vector<1x32xf32>, vector<8x32xf32>, vector<7x32xf32>, vector<1x32xf32>, vector<8x32xf32>, vector<7x32xf32> -> vector<32x32xf32>
    %c0_22 = arith.constant 0 : index
    %c0_23 = arith.constant 0 : index
    %42 = vector.load %arg8[%c0_22, %c0_23] : memref<32x32xf32, #tpu.memory_space<vmem>>, vector<32x32xf32>
    tpu.vector_store %arg8[%c0_22, %c0_23], %41 {strides = array<i32>} : memref<32x32xf32, #tpu.memory_space<vmem>>, vector<32x32xf32>,
    return
  }
  func.func @transform_0(%arg0: i32) -> (i32, i32) {
    %c0_i32 = arith.constant 0 : i32
    %c0_i32_0 = arith.constant 0 : i32
    %c0_i32_1 = arith.constant 0 : i32
    return %c0_i32, %c0_i32_0 : i32, i32
  }
  func.func @transform_1(%arg0: i32) -> (i32, i32) {
    %c0_i32 = arith.constant 0 : i32
    %c0_i32_0 = arith.constant 0 : i32
    %c0_i32_1 = arith.constant 0 : i32
    return %c0_i32, %c0_i32_0 : i32, i32
  }
  func.func @transform_2(%arg0: i32) -> (i32, i32) {
    %c0_i32 = arith.constant 0 : i32
    %c0_i32_0 = arith.constant 0 : i32
    %c0_i32_1 = arith.constant 0 : i32
    return %c0_i32, %c0_i32_0 : i32, i32
  }
  func.func @transform_3(%arg0: i32) -> (i32, i32) {
    %c0_i32 = arith.constant 0 : i32
    %c0_i32_0 = arith.constant 0 : i32
    %c0_i32_1 = arith.constant 0 : i32
    return %c0_i32, %c0_i32_0 : i32, i32
  }
  func.func @transform_4(%arg0: i32) -> (i32, i32) {
    %c0_i32 = arith.constant 0 : i32
    %c0_i32_0 = arith.constant 0 : i32
    %c0_i32_1 = arith.constant 0 : i32
    return %c0_i32, %c0_i32_0 : i32, i32
  }
  func.func @transform_5(%arg0: i32) -> (i32, i32) {
    %c0_i32 = arith.constant 0 : i32
    %c0_i32_0 = arith.constant 0 : i32
    %c0_i32_1 = arith.constant 0 : i32
    return %c0_i32, %c0_i32_0 : i32, i32
  }
  func.func @transform_6(%arg0: i32) -> (i32, i32) {
    %c0_i32 = arith.constant 0 : i32
    %c0_i32_0 = arith.constant 0 : i32
    %c0_i32_1 = arith.constant 0 : i32
    return %c0_i32, %c0_i32_0 : i32, i32
  }
  func.func @transform_7(%arg0: i32) -> (i32, i32) {
    %c0_i32 = arith.constant 0 : i32
    %c0_i32_0 = arith.constant 0 : i32
    %c0_i32_1 = arith.constant 0 : i32
    return %c0_i32, %c0_i32_0 : i32, i32
  }
}

</mosaic_0001>

<llo_original>
// kernel: tpu_custom_call.1
$region0: #{tpu_custom_call.1}
  #allocation0 [shape = 'u32[]', space=smem, size = 0x4, offset = 0x4, fixed_abs, tag = 'smem constant byte address 0x4 - core index']
  #allocation1 [shape = 'u32[144,128]{1,0:T(1,128)}', space=vmem, size = 0x12000, scoped, tag = 'internal scratch']
  %s0 = inlined_call_operand.hbm [shape: f32[16,16], index: 0, kind: input, shape index: {}]
  %s1 = inlined_call_operand.hbm [shape: bf16[16,16], index: 1, kind: input, shape index: {}]
  %s2 = inlined_call_operand.hbm [shape: bf16[16,16], index: 2, kind: input, shape index: {}]
  %s3 = inlined_call_operand.vmem [shape: bf16[16,32], index: 3, kind: input, shape index: {}]
  %s4 = inlined_call_operand.vmem [shape: f32[1,32], index: 4, kind: input, shape index: {}]
  %s5 = inlined_call_operand.vmem [shape: f32[1,32], index: 5, kind: input, shape index: {}]
  %s6 = inlined_call_operand.vmem [shape: f32[8,32], index: 6, kind: input, shape index: {}]
  %s7 = inlined_call_operand.hbm [shape: f32[32,32], index: 7, kind: output, shape index: {}]
  %s8 = sld [smem:[#allocation0]]
  $region50: #{tpu_custom_call.1} parent=0
    _
  %s10 = ssub.s32 1, %s8
  %s11 = scalar_select 0, %s10, %s8
  $region1: #{tpu_custom_call.1} parent=0
    #allocation2 [shape = 'u8[8192]{0}', space=vmem, size = 0x2000, scoped, tag = 'input window, operand 0, single buffered']
    #allocation3 [shape = 's32[1]{0}', space=sflag, size = 0x4, scoped, tag = 'scoped memory for tpu_custom_call.1']
    #allocation4 [shape = 's32[1]{0}', space=sflag, size = 0x4, scoped, tag = 'scoped memory for tpu_custom_call.1']
    #allocation5 [shape = 'u8[4096]{0}', space=vmem, size = 0x1000, scoped, tag = 'input window, operand 1, single buffered']
    #allocation6 [shape = 's32[1]{0}', space=sflag, size = 0x4, scoped, tag = 'scoped memory for tpu_custom_call.1']
    #allocation7 [shape = 'u8[4096]{0}', space=vmem, size = 0x1000, scoped, tag = 'input window, operand 2, single buffered']
    #allocation8 [shape = 'u8[16384]{0}', space=vmem, size = 0x4000, scoped, tag = 'output window, operand 0, single buffered']
    %12 = vsyncpa [#allocation3], 0
    %13 = vsyncpa [#allocation6], 0
    %14 = vsyncpa [#allocation4], 0
    // Predicated region
    $region2: #{tpu_custom_call.1} parent=1 // pred_check
      _
    $region3: #{tpu_custom_call.1} parent=1 // pred_check_branch
      %16 = sbr.rel (0) target = $region5
    $region4: #{tpu_custom_call.1} parent=1 // pred_region
      %s18 = ssub.s32 256, 256
      %19 = vsyncadd [#allocation3], %s18
      %s20 = sshll.u32 [#allocation2], 4
      %s21 = int_to_ptr.vmem [resolvable:$true] %s20
      %26 = dma.hbm_to_vmem [thread:$0]  %s0, 256, %s21, [#allocation3], 128, 128, 8
    $region5: #{tpu_custom_call.1} parent=1 // pred_fallthru
      _
    // Predicated region
    $region6: #{tpu_custom_call.1} parent=1 // pred_check
      _
    $region7: #{tpu_custom_call.1} parent=1 // pred_check_branch
      %28 = sbr.rel (0) target = $region9
    $region8: #{tpu_custom_call.1} parent=1 // pred_region
      %s30 = ssub.s32 128, 128
      %31 = vsyncadd [#allocation6], %s30
      %s32 = sshll.u32 [#allocation5], 4
      %s33 = int_to_ptr.vmem [resolvable:$true] %s32
      %38 = dma.hbm_to_vmem [thread:$0]  %s1, 128, %s33, [#allocation6], 64, 64, 4
    $region9: #{tpu_custom_call.1} parent=1 // pred_fallthru
      _
    // Predicated region
    $region10: #{tpu_custom_call.1} parent=1 // pred_check
      _
    $region11: #{tpu_custom_call.1} parent=1 // pred_check_branch
      %40 = sbr.rel (0) target = $region13
    $region12: #{tpu_custom_call.1} parent=1 // pred_region
      %s42 = ssub.s32 128, 128
      %43 = vsyncadd [#allocation6], %s42
      %s44 = sshll.u32 [#allocation7], 4
      %s45 = int_to_ptr.vmem [resolvable:$true] %s44
      %50 = dma.hbm_to_vmem [thread:$0]  %s2, 128, %s45, [#allocation6], 64, 64, 4
    $region13: #{tpu_custom_call.1} parent=1 // pred_fallthru
      _
    // Predicated region
    $region14: #{tpu_custom_call.1} parent=1 // pred_check
      _
    $region15: #{tpu_custom_call.1} parent=1 // pred_check_branch
      %52 = sbr.rel (0) target = $region17
    $region16: #{tpu_custom_call.1} parent=1 // pred_region
      _
    $region17: #{tpu_custom_call.1} parent=1 // pred_fallthru
      _
    // Predicated region
    $region18: #{tpu_custom_call.1} parent=1 // pred_check
      _
    $region19: #{tpu_custom_call.1} parent=1 // pred_check_branch
      %54 = sbr.rel (0) target = $region21
    $region20: #{tpu_custom_call.1} parent=1 // pred_region
      _
    $region21: #{tpu_custom_call.1} parent=1 // pred_fallthru
      _
    // Predicated region
    $region22: #{tpu_custom_call.1} parent=1 // pred_check
      _
    $region23: #{tpu_custom_call.1} parent=1 // pred_check_branch
      %56 = sbr.rel (0) target = $region25
    $region24: #{tpu_custom_call.1} parent=1 // pred_region
      _
    $region25: #{tpu_custom_call.1} parent=1 // pred_fallthru
      _
    // Predicated region
    $region26: #{tpu_custom_call.1} parent=1 // pred_check
      _
    $region27: #{tpu_custom_call.1} parent=1 // pred_check_branch
      %58 = sbr.rel (0) target = $region29
    $region28: #{tpu_custom_call.1} parent=1 // pred_region
      _
    $region29: #{tpu_custom_call.1} parent=1 // pred_fallthru
      _
    // Predicated region
    $region30: #{tpu_custom_call.1} parent=1 // pred_check
      _
    $region31: #{tpu_custom_call.1} parent=1 // pred_check_branch
      %60 = sbr.rel (0) target = $region33
    $region32: #{tpu_custom_call.1} parent=1 // pred_region
      %61 = dma.done [#allocation3], 256
    $region33: #{tpu_custom_call.1} parent=1 // pred_fallthru
      _
    // Predicated region
    $region34: #{tpu_custom_call.1} parent=1 // pred_check
      _
    $region35: #{tpu_custom_call.1} parent=1 // pred_check_branch
      %63 = sbr.rel (0) target = $region37
    $region36: #{tpu_custom_call.1} parent=1 // pred_region
      %64 = dma.done [#allocation6], 128
    $region37: #{tpu_custom_call.1} parent=1 // pred_fallthru
      _
    // Predicated region
    $region38: #{tpu_custom_call.1} parent=1 // pred_check
      _
    $region39: #{tpu_custom_call.1} parent=1 // pred_check_branch
      %66 = sbr.rel (0) target = $region41
    $region40: #{tpu_custom_call.1} parent=1 // pred_region
      %67 = dma.done [#allocation6], 128
    $region41: #{tpu_custom_call.1} parent=1 // pred_fallthru
      _
    %v69 = vld [vmem:[#allocation2] sm:$0xff]
    %v70 = vld [vmem:[#allocation2 + $0x8] sm:$0xff]
    %v71 = vpack.c.bf16 %v70, %v69
    %v72 = vld [vmem:[#allocation5] sm:$0xf]
    %v73 = vld [vmem:[#allocation5 + $0x4] sm:$0xf]
    %v76 = vunpack.c.l.b16 %v72
    %v77 = vunpack.c.l.b16 %v73
    %v78 = vpack.c.b16 %v77, %v76
    %vm80 = vcmask 130048
    %v82 = vsel %vm80, %v71, 0
    %84 = vmatprep.subr.bf16.mxu0 0
    %85 = vmatpush1.bf16.msra.mxu0 %v78
    %86 = vmatprep.subr.bf16.mxu0 0
    %87 = vmatpush1.bf16.msra.mxu0 0
    %88 = vmatprep.subr.bf16.mxu0 0
    %89 = vmatpush1.bf16.msra.mxu0 0
    %90 = vmatprep.subr.bf16.mxu0 0
    %91 = vmatpush1.bf16.msra.mxu0 0
    %92 = vmatprep.subr.bf16.mxu0 0
    %93 = vmatpush1.bf16.msra.mxu0 0
    %94 = vmatprep.subr.bf16.mxu0 0
    %95 = vmatpush1.bf16.msra.mxu0 0
    %96 = vmatprep.subr.bf16.mxu0 0
    %97 = vmatpush1.bf16.msra.mxu0 0
    %98 = vmatprep.subr.bf16.mxu0 0
    %99 = vmatpush1.bf16.msra.mxu0 0
    %100 = vmatprep.subr.bf16.mxu0 0
    %101 = vmatpush1.bf16.msra.mxu0 0
    %102 = vmatprep.subr.bf16.mxu0 0
    %103 = vmatpush1.bf16.msra.mxu0 0
    %104 = vmatprep.subr.bf16.mxu0 0
    %105 = vmatpush1.bf16.msra.mxu0 0
    %106 = vmatprep.subr.bf16.mxu0 0
    %107 = vmatpush1.bf16.msra.mxu0 0
    %108 = vmatprep.subr.bf16.mxu0 0
    %109 = vmatpush1.bf16.msra.mxu0 0
    %110 = vmatprep.subr.bf16.mxu0 0
    %111 = vmatpush1.bf16.msra.mxu0 0
    %112 = vmatprep.subr.bf16.mxu0 0
    %113 = vmatpush1.bf16.msra.mxu0 0
    %114 = vmatprep.subr.bf16.mxu0 0
    %115 = vmatpush1.bf16.msra.mxu0 0
    %116 = vmatprep.mubr.bf16.mxu0 0
    %117 = vmatmul.mubr.bf16.gmra.mrb[0].mxu0 %v82
    %v118 = vpop.f32.mrb[0].mxu0
    %v119 = vadd.f32 0.0, %v118
    %v120 = vpop.f32.mrb[0].mxu0
    %v121 = vpop.f32.mrb[0].mxu0
    %v122 = vadd.f32 0.0, %v121
    %v123 = vpop.f32.mrb[0].mxu0
    %124 = vdwg.mxu0
    %v125 = vld [vmem:[#allocation7] sm:$0xf]
    %v126 = vld [vmem:[#allocation7 + $0x4] sm:$0xf]
    %v129 = vunpack.c.l.b16 %v125
    %v130 = vunpack.c.l.b16 %v126
    %v131 = vpack.c.b16 %v130, %v129
    %133 = vmatprep.subr.bf16.mxu0 0
    %134 = vmatpush1.bf16.msra.mxu0 %v131
    %135 = vmatprep.subr.bf16.mxu0 0
    %136 = vmatpush1.bf16.msra.mxu0 0
    %137 = vmatprep.subr.bf16.mxu0 0
    %138 = vmatpush1.bf16.msra.mxu0 0
    %139 = vmatprep.subr.bf16.mxu0 0
    %140 = vmatpush1.bf16.msra.mxu0 0
    %141 = vmatprep.subr.bf16.mxu0 0
    %142 = vmatpush1.bf16.msra.mxu0 0
    %143 = vmatprep.subr.bf16.mxu0 0
    %144 = vmatpush1.bf16.msra.mxu0 0
    %145 = vmatprep.subr.bf16.mxu0 0
    %146 = vmatpush1.bf16.msra.mxu0 0
    %147 = vmatprep.subr.bf16.mxu0 0
    %148 = vmatpush1.bf16.msra.mxu0 0
    %149 = vmatprep.subr.bf16.mxu0 0
    %150 = vmatpush1.bf16.msra.mxu0 0
    %151 = vmatprep.subr.bf16.mxu0 0
    %152 = vmatpush1.bf16.msra.mxu0 0
    %153 = vmatprep.subr.bf16.mxu0 0
    %154 = vmatpush1.bf16.msra.mxu0 0
    %155 = vmatprep.subr.bf16.mxu0 0
    %156 = vmatpush1.bf16.msra.mxu0 0
    %157 = vmatprep.subr.bf16.mxu0 0
    %158 = vmatpush1.bf16.msra.mxu0 0
    %159 = vmatprep.subr.bf16.mxu0 0
    %160 = vmatpush1.bf16.msra.mxu0 0
    %161 = vmatprep.subr.bf16.mxu0 0
    %162 = vmatpush1.bf16.msra.mxu0 0
    %163 = vmatprep.subr.bf16.mxu0 0
    %164 = vmatpush1.bf16.msra.mxu0 0
    %165 = vmatprep.mubr.bf16.mxu0 0
    %166 = vmatmul.mubr.bf16.gmra.mrb[0].mxu0 %v82
    %v167 = vpop.f32.mrb[0].mxu0
    %v168 = vadd.f32 0.0, %v167
    %v169 = vpop.f32.mrb[0].mxu0
    %v170 = vpop.f32.mrb[0].mxu0
    %v171 = vadd.f32 0.0, %v170
    %v172 = vpop.f32.mrb[0].mxu0
    %173 = vdwg.mxu0
    %v174 = vmul.f32 %v119, %v119
    %v175 = vmul.f32 %v122, %v122
    %v176 = vmul.f32 %v168, %v168
    %v177 = vmul.f32 %v171, %v171
    %v178 = vadd.f32 %v174, %v176
    %v179 = vadd.f32 %v175, %v177
    %v180 = vrsqrt.pop %v178
    %v181 = vmul.f32 %v178, %v180
    %vm182 = vcmp.eq.f32.partialorder %v178, inf
    %v183 = vsel %vm182, %v178, %v181
    %vm184 = vcmp.eq.f32.partialorder %v178, 0.0
    %v185 = vand.u32 %v178, 2147483648
    %v186 = vsel %vm184, %v185, %v183
    %v187 = vrsqrt.pop %v179
    %v188 = vmul.f32 %v179, %v187
    %vm189 = vcmp.eq.f32.partialorder %v179, inf
    %v190 = vsel %vm189, %v179, %v188
    %vm191 = vcmp.eq.f32.partialorder %v179, 0.0
    %v192 = vand.u32 %v179, 2147483648
    %v193 = vsel %vm191, %v192, %v190
    %v194 = vadd.f32 %v186, 1e-10
    %v195 = vadd.f32 %v193, 1e-10
    %v196 = vlog2.pop %v194
    %v197 = vmul.f32 %v196, 0.6931472
    %v198 = vlog2.pop %v195
    %v199 = vmul.f32 %v198, 0.6931472
    %v200 = vsel %vm80, %v197, 0.0
    %201 = vadd.xlane.f32.xlu0 %v200
    %v202 = vpop.xlane.xlu0 %201
    %v203 = vsel %vm80, %v199, 0.0
    %204 = vadd.xlane.f32.xlu0 %v203
    %v205 = vpop.xlane.xlu0 %204
    %v206 = vrcp.pop 16.0
    %v207 = vmul.f32 %v202, %v206
    %v208 = vmul.f32 %v205, %v206
    %v209 = vsub.f32 %v197, %v207
    %v210 = vsub.f32 %v199, %v208
    %v211 = vmul.f32 %v209, %v209
    %v212 = vmul.f32 %v210, %v210
    %v213 = vsel %vm80, %v211, 0.0
    %214 = vadd.xlane.f32.xlu0 %v213
    %v215 = vpop.xlane.xlu0 %214
    %v216 = vsel %vm80, %v212, 0.0
    %217 = vadd.xlane.f32.xlu0 %v216
    %v218 = vpop.xlane.xlu0 %217
    %v219 = vrcp.pop 15.0
    %v220 = vmul.f32 %v215, %v219
    %v221 = vmul.f32 %v218, %v219
    %v222 = vrsqrt.pop %v220
    %v223 = vrsqrt.pop %v221
    %v224 = vmul.f32 %v209, %v222
    %v225 = vmul.f32 %v210, %v223
    %v226 = vpack.c.bf16 %v225, %v224
    %v227 = vld [vmem:[%s3] sm:$0xf]
    %v228 = vld [vmem:[%s3 + $0x4] sm:$0xf]
    %v229 = vld [vmem:[%s4] sm:$0x1]
    %v231 = vlaneseq
    %v232 = vshrl.u32 %v231, 7
    %v233 = vsub.s32 0, %v232
    %v234 = vrot.slane %v229, %v233
    %v238 = vunpack.c.l.b16 %v227
    %v239 = vunpack.c.l.b16 %v228
    %v240 = vpack.c.b16 %v239, %v238
    %v243 = vsel %vm80, %v226, 0
    %245 = vmatprep.subr.bf16.mxu0 0
    %246 = vmatpush1.bf16.msra.mxu0 %v240
    %247 = vmatprep.subr.bf16.mxu0 0
    %248 = vmatpush1.bf16.msra.mxu0 0
    %249 = vmatprep.subr.bf16.mxu0 0
    %250 = vmatpush1.bf16.msra.mxu0 0
    %251 = vmatprep.subr.bf16.mxu0 0
    %252 = vmatpush1.bf16.msra.mxu0 0
    %253 = vmatprep.subr.bf16.mxu0 0
    %254 = vmatpush1.bf16.msra.mxu0 0
    %255 = vmatprep.subr.bf16.mxu0 0
    %256 = vmatpush1.bf16.msra.mxu0 0
    %257 = vmatprep.subr.bf16.mxu0 0
    %258 = vmatpush1.bf16.msra.mxu0 0
    %259 = vmatprep.subr.bf16.mxu0 0
    %260 = vmatpush1.bf16.msra.mxu0 0
    %261 = vmatprep.subr.bf16.mxu0 0
    %262 = vmatpush1.bf16.msra.mxu0 0
    %263 = vmatprep.subr.bf16.mxu0 0
    %264 = vmatpush1.bf16.msra.mxu0 0
    %265 = vmatprep.subr.bf16.mxu0 0
    %266 = vmatpush1.bf16.msra.mxu0 0
    %267 = vmatprep.subr.bf16.mxu0 0
    %268 = vmatpush1.bf16.msra.mxu0 0
    %269 = vmatprep.subr.bf16.mxu0 0
    %270 = vmatpush1.bf16.msra.mxu0 0
    %271 = vmatprep.subr.bf16.mxu0 0
    %272 = vmatpush1.bf16.msra.mxu0 0
    %273 = vmatprep.subr.bf16.mxu0 0
    %274 = vmatpush1.bf16.msra.mxu0 0
    %275 = vmatprep.subr.bf16.mxu0 0
    %276 = vmatpush1.bf16.msra.mxu0 0
    %277 = vmatprep.mubr.bf16.mxu0 0
    %278 = vmatmul.mubr.bf16.gmra.mrb[0].mxu0 %v243
    %v279 = vpop.f32.mrb[0].mxu0
    %v280 = vadd.f32 %v234, %v279
    %v281 = vpop.f32.mrb[0].mxu0
    %v282 = vpop.f32.mrb[0].mxu0
    %v283 = vadd.f32 %v234, %v282
    %v284 = vpop.f32.mrb[0].mxu0
    %285 = vdwg.mxu0
    %v286 = vld [vmem:[%s5] sm:$0x1]
    %v287 = vld [vmem:[%s6] sm:$0xff]
    %v288 = vadd.f32 %v280, %v287
    %v289 = vadd.f32 %v283, %v287
    %v291 = vrot.slane %v288, 7
    %v294 = vrot.slane %v289, 7
    %vm296 = vcmask 1040384
    %v297 = vsel %vm296, %v286, %v291
    %v298 = vsel %vm296, %v291, 0.0
    %v299 = vsel %vm296, %v286, %v294
    %v300 = vsel %vm296, %v294, 0.0
    %vm301 = vcmask 261120
    %302 = vst.msk [vmem:[#allocation8] sm:$0xff] %vm301, %v297
    %303 = vst.msk [vmem:[#allocation8 + $0x8] sm:$0xff] %vm301, %v298
    %304 = vst.msk [vmem:[#allocation8 + $0x10] sm:$0xff] %vm301, %v299
    %305 = vst.msk [vmem:[#allocation8 + $0x18] sm:$0xff] %vm301, %v300
    // Predicated region
    $region42: #{tpu_custom_call.1} parent=1 // pred_check
      _
    $region43: #{tpu_custom_call.1} parent=1 // pred_check_branch
      %307 = sbr.rel (0) target = $region45
    $region44: #{tpu_custom_call.1} parent=1 // pred_region
      %s309 = ssub.s32 512, 512
      %310 = vsyncadd [#allocation4], %s309
      %s311 = sshll.u32 [#allocation8], 4
      %s312 = int_to_ptr.vmem [resolvable:$true] %s311
      %317 = dma.vmem_to_hbm [thread:$0]  %s312, 512, %s7, [#allocation4], 128, 128, 8
    $region45: #{tpu_custom_call.1} parent=1 // pred_fallthru
      _
    // Predicated region
    $region46: #{tpu_custom_call.1} parent=1 // pred_check
      _
    $region47: #{tpu_custom_call.1} parent=1 // pred_check_branch
      %319 = sbr.rel (0) target = $region49
    $region48: #{tpu_custom_call.1} parent=1 // pred_region
      %320 = dma.done [#allocation4], 512
    $region49: #{tpu_custom_call.1} parent=1 // pred_fallthru
      _
    %321 = vsyncpa [#allocation3], 1
    %322 = vsyncpa [#allocation6], 1
    %323 = vsyncpa [#allocation4], 1

</llo_original>
